<compile_context>
chip_gen: v7x
topology: tpu7x:2x2x1
jax: 0.10.0
libtpu: 0.0.40
codegen_flags: <defaults>
</compile_context>

<pallas_src>
import jax
import jax.numpy as jnp
from jax.experimental import pallas as pl
from jax.experimental.pallas import tpu as pltpu

FILTER_SIZES = (3, 4, 5)
K_MAX = max(FILTER_SIZES)


def _round_up(x, m):
    return (x + m - 1) // m * m


def _cnn_scorer_kernel(ids_ref, emb_ref, wflat_ref, pbias_ref,
                       wc1_ref, bc1_ref, wc2t_ref, bc2_ref, out_ref):
    """One batch tile: fused embed + conv1d(3/4/5) + ReLU + masked max-pool + classifier."""
    TB, L = ids_ref.shape
    V, D = emb_ref.shape
    KD, Fpad = wflat_ref.shape
    kmax = KD // D
    TBL = TB * L

    # 1) Embedding gather fused in-kernel as a one-hot matmul on the MXU.
    #    one-hot (exact 0/1) x bf16 table with f32 accumulation == exact lookup.
    ids = ids_ref[...]                                                    # (TB, L) int32
    vocab_iota = jax.lax.broadcasted_iota(jnp.int32, (TB, L, V), 2)
    onehot = jnp.where(ids[:, :, None] == vocab_iota, 1.0, 0.0)           # (TB, L, V) f32
    onehot = onehot.reshape(TBL, V).astype(jnp.bfloat16)                  # (TBL, V) bf16
    x = jnp.dot(onehot, emb_ref[...], preferred_element_type=jnp.float32)  # (TBL, D) f32
    xb = x.astype(jnp.bfloat16)                                           # single hoisted cast

    # 2) Conv1d(3/4/5) as ONE MXU contraction: bf16 im2col over the K_MAX taps
    #    (batch folded into M).  Tap j uses rows shifted by j; rows that wrap across
    #    samples only reach time steps masked to -inf in pbias, or zero-weight taps of
    #    shorter filter groups — so they never affect the result.
    taps = [xb] + [jnp.roll(xb, -j, axis=0) for j in range(1, kmax)]
    im2col = jnp.concatenate(taps, axis=1)                                # (TBL, K_MAX*D) bf16
    acc = jnp.dot(im2col, wflat_ref[...],
                  preferred_element_type=jnp.float32)                     # (TBL, Fpad) f32

    # 3) + (pos-conv bias + conv bias, -inf at invalid tail positions), ReLU, max-pool.
    #    ReLU turns the -inf rows into 0, which cannot beat the (>= 0) valid maxima.
    a = jnp.maximum(acc.reshape(TB, L, Fpad) + pbias_ref[...][None], 0.0)  # (TB, L, Fpad)
    pooled = jnp.max(a, axis=1)                                            # (TB, Fpad)

    # 4) Classifier: Dropout (identity at inference) -> ReLU -> Linear(Ftot,2) -> Linear(2,1).
    feat = jnp.maximum(pooled, 0.0)
    h = jnp.dot(feat, wc1_ref[...], preferred_element_type=jnp.float32) + bc1_ref[...]  # (TB, 2)
    # Final (2,1) projection on the VPU: broadcast-multiply + lane reduce (keeps MXU free).
    logit = jnp.sum(h * wc2t_ref[...], axis=-1, keepdims=True) + bc2_ref[...]           # (TB, 1)

    # 5) Narrow column store: only TB f32 per tile of HBM writeback.
    out_ref[...] = logit


def cnn_scorer_forward(seq1, seq2, params, *, batch_tile=128):
    """seq1, seq2: (B, L) int32 token ids. Returns (logits1, logits2), each (B,) float32."""
    word_emb = params['word_emb']                       # (V, D)  bf16
    pos_emb = params['pos_emb'].astype(jnp.float32)     # (L, D)  f32
    V, D = word_emb.shape
    L = pos_emb.shape[0]
    B = seq1.shape[0]
    assert seq1.shape == seq2.shape == (B, L)
    assert L >= K_MAX, "seq_len must be >= max filter size (L_out > 0)"
    assert batch_tile % 8 == 0

    # --- stack both sequences into one batch (single branch pass), pad to a tile multiple.
    ids = jnp.concatenate([seq1, seq2], axis=0).astype(jnp.int32)         # (2B, L)
    total = 2 * B
    # Batch tile: give the grid >= 2 steps as soon as the stacked batch exceeds one minimal
    # 8-row tile (megacore sharding on v7x, pipeline overlap of the ids DMA everywhere).
    if total <= batch_tile:
        TB = max(8, _round_up((total + 1) // 2, 8))
    else:
        TB = batch_tile
    Bpad = _round_up(total, TB)
    if Bpad != total:
        ids = jnp.pad(ids, ((0, Bpad - total), (0, 0)))                   # padded rows use id 0

    # --- fuse the three filter banks into one zero-padded (K_MAX, D, Fpad) weight,
    #     with the filter axis padded to a lane-dense multiple of 128.
    ws, bs, fsz = [], [], []
    for k in FILTER_SIZES:
        w = params[f'w{k}'].astype(jnp.float32)        # (k, D, Fk)
        ws.append(jnp.pad(w, ((0, K_MAX - k), (0, 0), (0, 0))))
        bs.append(params[f'b{k}'].astype(jnp.float32))  # (1, Fk)
        fsz.append(w.shape[-1])
    wconv = jnp.concatenate(ws, axis=2)                 # (K_MAX, D, Ftot) f32
    bconv = jnp.concatenate(bs, axis=1)                 # (1, Ftot) f32
    Ftot = wconv.shape[-1]
    Fpad = _round_up(Ftot, 128)
    wconv = jnp.pad(wconv, ((0, 0), (0, 0), (0, Fpad - Ftot)))            # zero pad channels
    bconv = jnp.pad(bconv, ((0, 0), (0, Fpad - Ftot)))
    wflat = wconv.reshape(K_MAX * D, Fpad).astype(jnp.bfloat16)           # (K_MAX*D, Fpad) bf16

    # --- fold pos_emb + conv bias + time-validity mask into one (L, Fpad) additive term.
    #     pbias[t] = sum_j pos[t+j] @ W_j + b  for valid t (zero-weight taps contribute 0),
    #     -inf where t > L - k for that filter group (padded channels are never masked).
    pos_pad = jnp.pad(pos_emb, ((0, K_MAX - 1), (0, 0)))                  # (L+K_MAX-1, D)
    pbias = sum(pos_pad[j:j + L] @ wconv[j] for j in range(K_MAX))        # (L, Fpad)
    pbias = pbias + bconv
    t = jnp.arange(L, dtype=jnp.int32)[:, None]
    tmax = jnp.concatenate(
        [jnp.full((1, f), L - k, jnp.int32) for k, f in zip(FILTER_SIZES, fsz)]
        + [jnp.full((1, Fpad - Ftot), L, jnp.int32)], axis=1)             # (1, Fpad)
    pbias = jnp.where(t <= tmax, pbias, -jnp.inf).astype(jnp.float32)     # (L, Fpad)

    # --- classifier weights (rows padded to Fpad with zeros; padded features are 0 anyway).
    wc1 = jnp.pad(params['wc1'].astype(jnp.float32), ((0, Fpad - Ftot), (0, 0)))  # (Fpad, C)
    bc1 = params['bc1'].astype(jnp.float32)            # (1, C)
    wc2t = params['wc2'].astype(jnp.float32).T          # (1, C)  Linear(2,1) weight, transposed
    bc2 = params['bc2'].astype(jnp.float32)             # (1, 1)
    NC = wc1.shape[1]

    grid = (Bpad // TB,)
    out = pl.pallas_call(
        _cnn_scorer_kernel,
        out_shape=jax.ShapeDtypeStruct((Bpad, 1), jnp.float32),
        grid=grid,
        in_specs=[
            pl.BlockSpec((TB, L), lambda i: (i, 0)),             # token ids (per batch tile)
            pl.BlockSpec((V, D), lambda i: (0, 0)),              # word embedding table (resident)
            pl.BlockSpec((K_MAX * D, Fpad), lambda i: (0, 0)),   # fused im2col conv weight (bf16)
            pl.BlockSpec((L, Fpad), lambda i: (0, 0)),           # pos/conv bias + -inf time mask
            pl.BlockSpec((Fpad, NC), lambda i: (0, 0)),          # classifier Linear(Ftot,2) W
            pl.BlockSpec((1, NC), lambda i: (0, 0)),             # classifier Linear(Ftot,2) b
            pl.BlockSpec((1, NC), lambda i: (0, 0)),             # Linear(2,1) W (transposed)
            pl.BlockSpec((1, 1), lambda i: (0, 0)),              # Linear(2,1) b
        ],
        out_specs=pl.BlockSpec((TB, 1), lambda i: (i, 0)),
        compiler_params=pltpu.CompilerParams(
            # batch tiles are independent -> shard across TensorCores on v7x (no-op v5e/v6e)
            dimension_semantics=("parallel",),
            # 32 MiB clears v5e's 16 MiB default scoped limit and fits v7x's 64 MiB physical
            # VMEM; the per-tile working set here is tiny.  If the model ever grows, shrink
            # batch_tile first (or single-buffer the constant-index specs via pl.Buffered(1)).
            vmem_limit_bytes=32 * 1024 * 1024,
        ),
    )(ids, word_emb, wflat, pbias, wc1, bc1, wc2t, bc2)

    logits = out[:, 0]
    return logits[:B], logits[B:total]


def init_params(key, vocab=20, L=8, D=32, num_filters=(8, 8, 8), num_classes=2):
    ks = jax.random.split(key, 12)

    def n(k, shape, scale=0.1):
        return (scale * jax.random.normal(k, shape)).astype(jnp.float32)

    F3, F4, F5 = num_filters
    Ftot = sum(num_filters)
    return dict(
        # embedding and conv weights are stored bf16 (halves the HBM/VMEM weight stream);
        # biases and the tiny classifier head stay f32.
        word_emb=n(ks[0], (vocab, D)).astype(jnp.bfloat16),   # pretrained_word_emb (vocab, D)
        pos_emb=n(ks[1], (L, D)),                             # pretrained_pos_emb  (L, D)
        w3=n(ks[2], (3, D, F3)).astype(jnp.bfloat16), b3=n(ks[3], (1, F3)),
        w4=n(ks[4], (4, D, F4)).astype(jnp.bfloat16), b4=n(ks[5], (1, F4)),
        w5=n(ks[6], (5, D, F5)).astype(jnp.bfloat16), b5=n(ks[7], (1, F5)),
        wc1=n(ks[8], (Ftot, num_classes)), bc1=n(ks[9], (1, num_classes)),
        wc2=n(ks[10], (num_classes, 1)), bc2=n(ks[11], (1, 1)),
    )


def reference(seq1, seq2, p):
    """Pure-JAX f32 reference mirroring the PyTorch forward (eval mode), same param values."""
    we = p['word_emb'].astype(jnp.float32)

    def branch(seq):
        x = jnp.take(we, seq, axis=0) + p['pos_emb'][None]
        pools = []
        for k in FILTER_SIZES:
            w = p[f'w{k}'].astype(jnp.float32)
            b = p[f'b{k}']
            L_out = x.shape[1] - k + 1
            acc = jnp.zeros((x.shape[0], L_out, w.shape[-1]), jnp.float32)
            for j in range(k):
                acc = acc + jnp.einsum('btd,df->btf', x[:, j:j + L_out, :], w[j])
            acc = jax.nn.relu(acc + b[None])
            pools.append(jnp.max(acc, axis=1))
        feat = jax.nn.relu(jnp.concatenate(pools, axis=1))
        h = feat @ p['wc1'] + p['bc1']
        out = h @ p['wc2'] + p['bc2']              # (B, 1); mean over width-1 dim is identity
        return out[:, 0]

    return branch(seq1), branch(seq2)


if __name__ == "__main__":
    key = jax.random.PRNGKey(0)
    B, L, D, vocab = 2, 8, 32, 20
    params = init_params(key, vocab=vocab, L=L, D=D)

    k1, k2 = jax.random.split(jax.random.fold_in(key, 1))
    seq1 = jax.random.randint(k1, (B, L), 0, vocab, dtype=jnp.int32)
    seq2 = jax.random.randint(k2, (B, L), 0, vocab, dtype=jnp.int32)

    logits1, logits2 = cnn_scorer_forward(seq1, seq2, params)
    jax.block_until_ready((logits1, logits2))

    r1, r2 = reference(seq1, seq2, params)
    assert logits1.shape == (B,) and logits2.shape == (B,)
    # bf16 MXU operands (exactly-representable values, f32 accumulation) vs. the f32
    # reference -> only accumulation-order slack.
    assert jnp.allclose(logits1, r1, atol=2e-3), (logits1, r1)
    assert jnp.allclose(logits2, r2, atol=2e-3), (logits2, r2)
    print("KERNEL_OK")
</pallas_src>

<mosaic_0001>
module attributes {stable_mosaic.version = 11 : i64} {
  func.func @_cnn_scorer_kernel(%arg0: i32, %arg1: memref<8x8xi32, #tpu.memory_space<vmem>>, %arg2: memref<20x32xbf16, #tpu.memory_space<vmem>>, %arg3: memref<160x128xbf16, #tpu.memory_space<vmem>>, %arg4: memref<8x128xf32, #tpu.memory_space<vmem>>, %arg5: memref<128x2xf32, #tpu.memory_space<vmem>>, %arg6: memref<1x2xf32, #tpu.memory_space<vmem>>, %arg7: memref<1x2xf32, #tpu.memory_space<vmem>>, %arg8: memref<1x1xf32, #tpu.memory_space<vmem>>, %arg9: memref<8x1xf32, #tpu.memory_space<vmem>>) attributes {dimension_semantics = [#tpu.dimension_semantics<parallel>], iteration_bounds = array<i64: 1>, scalar_prefetch = 0 : i64, scratch_operands = 0 : i64, tpu.core_type = #tpu.core_type<tc>, window_params = [{transform_indices = @transform_0, window_bounds = array<i64: 8, 8>}, {pipeline_mode = #tpu.pipeline_mode<synchronous>, transform_indices = @transform_1, window_bounds = array<i64: 20, 32>}, {pipeline_mode = #tpu.pipeline_mode<synchronous>, transform_indices = @transform_2, window_bounds = array<i64: 160, 128>}, {pipeline_mode = #tpu.pipeline_mode<synchronous>, transform_indices = @transform_3, window_bounds = array<i64: 8, 128>}, {pipeline_mode = #tpu.pipeline_mode<synchronous>, transform_indices = @transform_4, window_bounds = array<i64: 128, 2>}, {pipeline_mode = #tpu.pipeline_mode<synchronous>, transform_indices = @transform_5, window_bounds = array<i64: 1, 2>}, {pipeline_mode = #tpu.pipeline_mode<synchronous>, transform_indices = @transform_6, window_bounds = array<i64: 1, 2>}, {pipeline_mode = #tpu.pipeline_mode<synchronous>, transform_indices = @transform_7, window_bounds = array<i64: 1, 1>}, {transform_indices = @transform_8, window_bounds = array<i64: 8, 1>}]} {
    %c0 = arith.constant 0 : index
    %c0_0 = arith.constant 0 : index
    %0 = vector.load %arg1[%c0, %c0_0] : memref<8x8xi32, #tpu.memory_space<vmem>>, vector<8x8xi32>
    %1 = tpu.iota {dimensions = array<i32: 2>} : vector<8x8x20xi32>
    %2 = vector.shape_cast %0 : vector<8x8xi32> to vector<8x8x1xi32>
    %3 = vector.broadcast %2 : vector<8x8x1xi32> to vector<8x8x20xi32>
    %4 = arith.cmpi eq, %3, %1 : vector<8x8x20xi32>
    %cst = arith.constant 1.000000e+00 : f32
    %cst_1 = arith.constant 0.000000e+00 : f32
    %5 = vector.broadcast %cst : f32 to vector<8x8x20xf32>
    %6 = vector.broadcast %cst_1 : f32 to vector<8x8x20xf32>
    %7 = arith.select %4, %5, %6 : vector<8x8x20xi1>, vector<8x8x20xf32>
    %8 = vector.shape_cast %7 : vector<8x8x20xf32> to vector<64x20xf32>
    %9 = arith.truncf %8 : vector<64x20xf32> to vector<64x20xbf16>
    %c0_2 = arith.constant 0 : index
    %c0_3 = arith.constant 0 : index
    %10 = vector.load %arg2[%c0_2, %c0_3] : memref<20x32xbf16, #tpu.memory_space<vmem>>, vector<20x32xbf16>
    %cst_4 = arith.constant dense<0.000000e+00> : vector<64x32xf32>
    %11 = tpu.matmul %9, %10, %cst_4 {dimension_numbers = #tpu.dot_dimension_numbers<[1], [0], [0], [1], [0, 0, 1, 1], [], []>} : vector<64x20xbf16>, vector<20x32xbf16>, vector<64x32xf32> -> vector<64x32xf32>
    %12 = arith.truncf %11 : vector<64x32xf32> to vector<64x32xbf16>
    %13 = vector.extract_strided_slice %12 {offsets = [1, 0], sizes = [63, 32], strides = [1, 1]} : vector<64x32xbf16> to vector<63x32xbf16>
    %14 = vector.extract_strided_slice %12 {offsets = [0, 0], sizes = [1, 32], strides = [1, 1]} : vector<64x32xbf16> to vector<1x32xbf16>
    %15 = tpu.concatenate %13, %14 in 0 : vector<63x32xbf16>, vector<1x32xbf16> -> vector<64x32xbf16>
    %16 = vector.extract_strided_slice %12 {offsets = [2, 0], sizes = [62, 32], strides = [1, 1]} : vector<64x32xbf16> to vector<62x32xbf16>
    %17 = vector.extract_strided_slice %12 {offsets = [0, 0], sizes = [2, 32], strides = [1, 1]} : vector<64x32xbf16> to vector<2x32xbf16>
    %18 = tpu.concatenate %16, %17 in 0 : vector<62x32xbf16>, vector<2x32xbf16> -> vector<64x32xbf16>
    %19 = vector.extract_strided_slice %12 {offsets = [3, 0], sizes = [61, 32], strides = [1, 1]} : vector<64x32xbf16> to vector<61x32xbf16>
    %20 = vector.extract_strided_slice %12 {offsets = [0, 0], sizes = [3, 32], strides = [1, 1]} : vector<64x32xbf16> to vector<3x32xbf16>
    %21 = tpu.concatenate %19, %20 in 0 : vector<61x32xbf16>, vector<3x32xbf16> -> vector<64x32xbf16>
    %22 = vector.extract_strided_slice %12 {offsets = [4, 0], sizes = [60, 32], strides = [1, 1]} : vector<64x32xbf16> to vector<60x32xbf16>
    %23 = vector.extract_strided_slice %12 {offsets = [0, 0], sizes = [4, 32], strides = [1, 1]} : vector<64x32xbf16> to vector<4x32xbf16>
    %24 = tpu.concatenate %22, %23 in 0 : vector<60x32xbf16>, vector<4x32xbf16> -> vector<64x32xbf16>
    %25 = tpu.concatenate %12, %15, %18, %21, %24 in 1 : vector<64x32xbf16>, vector<64x32xbf16>, vector<64x32xbf16>, vector<64x32xbf16>, vector<64x32xbf16> -> vector<64x160xbf16>
    %c0_5 = arith.constant 0 : index
    %c0_6 = arith.constant 0 : index
    %26 = vector.load %arg3[%c0_5, %c0_6] : memref<160x128xbf16, #tpu.memory_space<vmem>>, vector<160x128xbf16>
    %cst_7 = arith.constant dense<0.000000e+00> : vector<64x128xf32>
    %27 = tpu.matmul %25, %26, %cst_7 {dimension_numbers = #tpu.dot_dimension_numbers<[1], [0], [0], [1], [0, 0, 1, 1], [], []>} : vector<64x160xbf16>, vector<160x128xbf16>, vector<64x128xf32> -> vector<64x128xf32>
    %28 = vector.shape_cast %27 : vector<64x128xf32> to vector<8x8x128xf32>
    %c0_8 = arith.constant 0 : index
    %c0_9 = arith.constant 0 : index
    %29 = vector.load %arg4[%c0_8, %c0_9] : memref<8x128xf32, #tpu.memory_space<vmem>>, vector<8x128xf32>
    %30 = vector.shape_cast %29 : vector<8x128xf32> to vector<1x8x128xf32>
    %31 = vector.broadcast %30 : vector<1x8x128xf32> to vector<8x8x128xf32>
    %32 = arith.addf %28, %31 : vector<8x8x128xf32>
    %cst_10 = arith.constant 0.000000e+00 : f32
    %33 = vector.broadcast %cst_10 : f32 to vector<8x8x128xf32>
    %34 = arith.maximumf %32, %33 : vector<8x8x128xf32>
    %cst_11 = arith.constant dense<0xFF800000> : vector<8x128xf32>
    %35 = vector.multi_reduction <maximumf>, %34, %cst_11 [1] : vector<8x8x128xf32> to vector<8x128xf32>
    %cst_12 = arith.constant 0.000000e+00 : f32
    %36 = vector.broadcast %cst_12 : f32 to vector<8x128xf32>
    %37 = arith.maximumf %35, %36 : vector<8x128xf32>
    %c0_13 = arith.constant 0 : index
    %c0_14 = arith.constant 0 : index
    %38 = vector.load %arg5[%c0_13, %c0_14] : memref<128x2xf32, #tpu.memory_space<vmem>>, vector<128x2xf32>
    %cst_15 = arith.constant dense<0.000000e+00> : vector<8x2xf32>
    %39 = tpu.matmul %37, %38, %cst_15 {dimension_numbers = #tpu.dot_dimension_numbers<[1], [0], [0], [1], [0, 0, 1, 1], [], []>} : vector<8x128xf32>, vector<128x2xf32>, vector<8x2xf32> -> vector<8x2xf32>
    %c0_16 = arith.constant 0 : index
    %c0_17 = arith.constant 0 : index
    %40 = vector.load %arg6[%c0_16, %c0_17] : memref<1x2xf32, #tpu.memory_space<vmem>>, vector<1x2xf32>
    %41 = vector.broadcast %40 : vector<1x2xf32> to vector<8x2xf32>
    %42 = arith.addf %39, %41 : vector<8x2xf32>
    %c0_18 = arith.constant 0 : index
    %c0_19 = arith.constant 0 : index
    %43 = vector.load %arg7[%c0_18, %c0_19] : memref<1x2xf32, #tpu.memory_space<vmem>>, vector<1x2xf32>
    %44 = vector.broadcast %43 : vector<1x2xf32> to vector<8x2xf32>
    %45 = arith.mulf %42, %44 : vector<8x2xf32>
    %cst_20 = arith.constant dense<0.000000e+00> : vector<8xf32>
    %46 = vector.multi_reduction <add>, %45, %cst_20 [1] : vector<8x2xf32> to vector<8xf32>
    %47 = vector.shape_cast %46 : vector<8xf32> to vector<8x1xf32>
    %c0_21 = arith.constant 0 : index
    %c0_22 = arith.constant 0 : index
    %48 = vector.load %arg8[%c0_21, %c0_22] : memref<1x1xf32, #tpu.memory_space<vmem>>, vector<1x1xf32>
    %49 = vector.broadcast %48 : vector<1x1xf32> to vector<8x1xf32>
    %50 = arith.addf %47, %49 : vector<8x1xf32>
    %c0_23 = arith.constant 0 : index
    %c0_24 = arith.constant 0 : index
    %51 = vector.load %arg9[%c0_23, %c0_24] : memref<8x1xf32, #tpu.memory_space<vmem>>, vector<8x1xf32>
    tpu.vector_store %arg9[%c0_23, %c0_24], %50 {strides = array<i32>} : memref<8x1xf32, #tpu.memory_space<vmem>>, vector<8x1xf32>,
    return
  }
  func.func @transform_0(%arg0: i32) -> (i32, i32) {
    %c0_i32 = arith.constant 0 : i32
    %c0_i32_0 = arith.constant 0 : i32
    return %arg0, %c0_i32 : i32, i32
  }
  func.func @transform_1(%arg0: i32) -> (i32, i32) {
    %c0_i32 = arith.constant 0 : i32
    %c0_i32_0 = arith.constant 0 : i32
    %c0_i32_1 = arith.constant 0 : i32
    return %c0_i32, %c0_i32_0 : i32, i32
  }
  func.func @transform_2(%arg0: i32) -> (i32, i32) {
    %c0_i32 = arith.constant 0 : i32
    %c0_i32_0 = arith.constant 0 : i32
    %c0_i32_1 = arith.constant 0 : i32
    return %c0_i32, %c0_i32_0 : i32, i32
  }
  func.func @transform_3(%arg0: i32) -> (i32, i32) {
    %c0_i32 = arith.constant 0 : i32
    %c0_i32_0 = arith.constant 0 : i32
    %c0_i32_1 = arith.constant 0 : i32
    return %c0_i32, %c0_i32_0 : i32, i32
  }
  func.func @transform_4(%arg0: i32) -> (i32, i32) {
    %c0_i32 = arith.constant 0 : i32
    %c0_i32_0 = arith.constant 0 : i32
    %c0_i32_1 = arith.constant 0 : i32
    return %c0_i32, %c0_i32_0 : i32, i32
  }
  func.func @transform_5(%arg0: i32) -> (i32, i32) {
    %c0_i32 = arith.constant 0 : i32
    %c0_i32_0 = arith.constant 0 : i32
    %c0_i32_1 = arith.constant 0 : i32
    return %c0_i32, %c0_i32_0 : i32, i32
  }
  func.func @transform_6(%arg0: i32) -> (i32, i32) {
    %c0_i32 = arith.constant 0 : i32
    %c0_i32_0 = arith.constant 0 : i32
    %c0_i32_1 = arith.constant 0 : i32
    return %c0_i32, %c0_i32_0 : i32, i32
  }
  func.func @transform_7(%arg0: i32) -> (i32, i32) {
    %c0_i32 = arith.constant 0 : i32
    %c0_i32_0 = arith.constant 0 : i32
    %c0_i32_1 = arith.constant 0 : i32
    return %c0_i32, %c0_i32_0 : i32, i32
  }
  func.func @transform_8(%arg0: i32) -> (i32, i32) {
    %c0_i32 = arith.constant 0 : i32
    %c0_i32_0 = arith.constant 0 : i32
    return %arg0, %c0_i32 : i32, i32
  }
}

</mosaic_0001>

<llo_original>
// kernel: tpu_custom_call.1
$region0: #{tpu_custom_call.1}
  #allocation0 [shape = 'u32[]', space=smem, size = 0x4, offset = 0x4, fixed_abs, tag = 'smem constant byte address 0x4 - core index']
  #allocation1 [shape = 'u32[144,128]{1,0:T(1,128)}', space=vmem, size = 0x12000, scoped, tag = 'internal scratch']
  #allocation2 [shape = 'f32[1,1]{1,0:T(1,128)S(1)}', space=vmem, size = 0x200, scoped, tag = 'scoped memory for tpu_custom_call.1']
  %s0 = inlined_call_operand.vmem [shape: s32[8,8], index: 0, kind: input, shape index: {}]
  %s1 = inlined_call_operand.vmem [shape: bf16[20,32], index: 1, kind: input, shape index: {}]
  %s2 = inlined_call_operand.vmem [shape: bf16[160,128], index: 2, kind: input, shape index: {}]
  %s3 = inlined_call_operand.vmem [shape: f32[8,128], index: 3, kind: input, shape index: {}]
  %s4 = inlined_call_operand.vmem [shape: f32[128,2], index: 4, kind: input, shape index: {}]
  %s5 = inlined_call_operand.vmem [shape: f32[1,2], index: 5, kind: input, shape index: {}]
  %s6 = inlined_call_operand.vmem [shape: f32[1,2], index: 6, kind: input, shape index: {}]
  %s7 = inlined_call_operand.<no memory space> [shape: f32[1,1], index: 7, kind: input, shape index: {}]
  %s8 = inlined_call_operand.vmem [shape: f32[8,1], index: 8, kind: output, shape index: {}]
  %s9 = sld [smem:[#allocation0]]
  $region42: #{tpu_custom_call.1} parent=0
    _
  %s11 = ssub.s32 1, %s9
  %s12 = scalar_select 0, %s11, %s9
  %v13 = vstv %s7
  %14 = vst [vmem:[#allocation2] sm:$0x1] %v13
  // Predicated region
  $region2: #{tpu_custom_call.1} parent=0 // pred_check
    _
  $region3: #{tpu_custom_call.1} parent=0 // pred_check_branch
    %16 = sbr.rel (0) target = $region5
  $region4: #{tpu_custom_call.1} parent=0 // pred_region
    _
  $region5: #{tpu_custom_call.1} parent=0 // pred_fallthru
    _
  // Predicated region
  $region6: #{tpu_custom_call.1} parent=0 // pred_check
    _
  $region7: #{tpu_custom_call.1} parent=0 // pred_check_branch
    %18 = sbr.rel (0) target = $region9
  $region8: #{tpu_custom_call.1} parent=0 // pred_region
    _
  $region9: #{tpu_custom_call.1} parent=0 // pred_fallthru
    _
  // Predicated region
  $region10: #{tpu_custom_call.1} parent=0 // pred_check
    _
  $region11: #{tpu_custom_call.1} parent=0 // pred_check_branch
    %20 = sbr.rel (0) target = $region13
  $region12: #{tpu_custom_call.1} parent=0 // pred_region
    _
  $region13: #{tpu_custom_call.1} parent=0 // pred_fallthru
    _
  // Predicated region
  $region14: #{tpu_custom_call.1} parent=0 // pred_check
    _
  $region15: #{tpu_custom_call.1} parent=0 // pred_check_branch
    %22 = sbr.rel (0) target = $region17
  $region16: #{tpu_custom_call.1} parent=0 // pred_region
    _
  $region17: #{tpu_custom_call.1} parent=0 // pred_fallthru
    _
  // Predicated region
  $region18: #{tpu_custom_call.1} parent=0 // pred_check
    _
  $region19: #{tpu_custom_call.1} parent=0 // pred_check_branch
    %24 = sbr.rel (0) target = $region21
  $region20: #{tpu_custom_call.1} parent=0 // pred_region
    _
  $region21: #{tpu_custom_call.1} parent=0 // pred_fallthru
    _
  // Predicated region
  $region22: #{tpu_custom_call.1} parent=0 // pred_check
    _
  $region23: #{tpu_custom_call.1} parent=0 // pred_check_branch
    %26 = sbr.rel (0) target = $region25
  $region24: #{tpu_custom_call.1} parent=0 // pred_region
    _
  $region25: #{tpu_custom_call.1} parent=0 // pred_fallthru
    _
  // Predicated region
  $region26: #{tpu_custom_call.1} parent=0 // pred_check
    _
  $region27: #{tpu_custom_call.1} parent=0 // pred_check_branch
    %28 = sbr.rel (0) target = $region29
  $region28: #{tpu_custom_call.1} parent=0 // pred_region
    _
  $region29: #{tpu_custom_call.1} parent=0 // pred_fallthru
    _
  // Predicated region
  $region30: #{tpu_custom_call.1} parent=0 // pred_check
    _
  $region31: #{tpu_custom_call.1} parent=0 // pred_check_branch
    %30 = sbr.rel (0) target = $region33
  $region32: #{tpu_custom_call.1} parent=0 // pred_region
    _
  $region33: #{tpu_custom_call.1} parent=0 // pred_fallthru
    _
  %v32 = vld [vmem:[%s0] sm:$0xff]
  %v33 = vlaneseq
  %v34 = vand.u32 %v33, 127
  %v35 = vlaneseq
  %v36 = vshrl.u32 %v35, 7
  %v37 = vsub.s32 0, %v36
  %v38 = vrot.slane %v32, %v37
  %40 = vbcast.lane.b32.xlu0 %v38, 256
  %v41 = vpop.permute.xlu0 %40
  %v42 = vlaneseq
  %v43 = vshrl.u32 %v42, 7
  %v44 = vsub.s32 1, %v43
  %v45 = vrot.slane %v32, %v44
  %47 = vbcast.lane.b32.xlu0 %v45, 256
  %v48 = vpop.permute.xlu0 %47
  %v49 = vlaneseq
  %v50 = vshrl.u32 %v49, 7
  %v51 = vsub.s32 2, %v50
  %v52 = vrot.slane %v32, %v51
  %54 = vbcast.lane.b32.xlu0 %v52, 256
  %v55 = vpop.permute.xlu0 %54
  %v56 = vlaneseq
  %v57 = vshrl.u32 %v56, 7
  %v58 = vsub.s32 3, %v57
  %v59 = vrot.slane %v32, %v58
  %61 = vbcast.lane.b32.xlu0 %v59, 256
  %v62 = vpop.permute.xlu0 %61
  %v63 = vlaneseq
  %v64 = vshrl.u32 %v63, 7
  %v65 = vsub.s32 4, %v64
  %v66 = vrot.slane %v32, %v65
  %68 = vbcast.lane.b32.xlu0 %v66, 256
  %v69 = vpop.permute.xlu0 %68
  %v70 = vlaneseq
  %v71 = vshrl.u32 %v70, 7
  %v72 = vsub.s32 5, %v71
  %v73 = vrot.slane %v32, %v72
  %75 = vbcast.lane.b32.xlu0 %v73, 256
  %v76 = vpop.permute.xlu0 %75
  %v77 = vlaneseq
  %v78 = vshrl.u32 %v77, 7
  %v79 = vsub.s32 6, %v78
  %v80 = vrot.slane %v32, %v79
  %82 = vbcast.lane.b32.xlu0 %v80, 256
  %v83 = vpop.permute.xlu0 %82
  %v84 = vlaneseq
  %v85 = vshrl.u32 %v84, 7
  %v86 = vsub.s32 7, %v85
  %v87 = vrot.slane %v32, %v86
  %89 = vbcast.lane.b32.xlu0 %v87, 256
  %v90 = vpop.permute.xlu0 %89
  %vm91 = vcmp.eq.s32.totalorder %v41, %v34
  %vm92 = vcmp.eq.s32.totalorder %v48, %v34
  %vm93 = vcmp.eq.s32.totalorder %v55, %v34
  %vm94 = vcmp.eq.s32.totalorder %v62, %v34
  %vm95 = vcmp.eq.s32.totalorder %v69, %v34
  %vm96 = vcmp.eq.s32.totalorder %v76, %v34
  %vm97 = vcmp.eq.s32.totalorder %v83, %v34
  %vm98 = vcmp.eq.s32.totalorder %v90, %v34
  %v99 = vsel %vm91, 1.0, 0.0
  %v100 = vsel %vm92, 1.0, 0.0
  %v101 = vsel %vm93, 1.0, 0.0
  %v102 = vsel %vm94, 1.0, 0.0
  %v103 = vsel %vm95, 1.0, 0.0
  %v104 = vsel %vm96, 1.0, 0.0
  %v105 = vsel %vm97, 1.0, 0.0
  %v106 = vsel %vm98, 1.0, 0.0
  %v107 = vpack.c.bf16 %v100, %v99
  %v108 = vpack.c.bf16 %v102, %v101
  %v109 = vpack.c.bf16 %v104, %v103
  %v110 = vpack.c.bf16 %v106, %v105
  %v111 = vld [vmem:[%s1] sm:$0xf]
  %v112 = vld [vmem:[%s1 + $0x4] sm:$0xf]
  %v113 = vld [vmem:[%s1 + $0x8] sm:$0x3]
  %v117 = vunpack.c.l.b16 %v111
  %v118 = vunpack.c.l.b16 %v112
  %v119 = vunpack.c.l.b16 %v113
  %v120 = vpack.c.b16 %v118, %v117
  %v121 = vpack.c.b16 %v119, %v119
  %vm123 = vcmask 162816
  %v125 = vsel %vm123, %v107, 0
  %v128 = vsel %vm123, %v108, 0
  %v131 = vsel %vm123, %v109, 0
  %v134 = vsel %vm123, %v110, 0
  %vm136 = vcmask 1041408
  %v138 = vsel %vm136, %v121, 0
  %140 = vmatprep.subr.bf16.mxu0 0
  %141 = vmatpush1.bf16.msra.mxu0 %v120
  %142 = vmatprep.subr.bf16.mxu0 0
  %143 = vmatpush1.bf16.msra.mxu0 %v138
  %144 = vmatprep.subr.bf16.mxu0 0
  %145 = vmatpush1.bf16.msra.mxu0 0
  %146 = vmatprep.subr.bf16.mxu0 0
  %147 = vmatpush1.bf16.msra.mxu0 0
  %148 = vmatprep.subr.bf16.mxu0 0
  %149 = vmatpush1.bf16.msra.mxu0 0
  %150 = vmatprep.subr.bf16.mxu0 0
  %151 = vmatpush1.bf16.msra.mxu0 0
  %152 = vmatprep.subr.bf16.mxu0 0
  %153 = vmatpush1.bf16.msra.mxu0 0
  %154 = vmatprep.subr.bf16.mxu0 0
  %155 = vmatpush1.bf16.msra.mxu0 0
  %156 = vmatprep.subr.bf16.mxu0 0
  %157 = vmatpush1.bf16.msra.mxu0 0
  %158 = vmatprep.subr.bf16.mxu0 0
  %159 = vmatpush1.bf16.msra.mxu0 0
  %160 = vmatprep.subr.bf16.mxu0 0
  %161 = vmatpush1.bf16.msra.mxu0 0
  %162 = vmatprep.subr.bf16.mxu0 0
  %163 = vmatpush1.bf16.msra.mxu0 0
  %164 = vmatprep.subr.bf16.mxu0 0
  %165 = vmatpush1.bf16.msra.mxu0 0
  %166 = vmatprep.subr.bf16.mxu0 0
  %167 = vmatpush1.bf16.msra.mxu0 0
  %168 = vmatprep.subr.bf16.mxu0 0
  %169 = vmatpush1.bf16.msra.mxu0 0
  %170 = vmatprep.subr.bf16.mxu0 0
  %171 = vmatpush1.bf16.msra.mxu0 0
  %172 = vmatprep.mubr.bf16.mxu0 0
  %173 = vmatmul.mubr.bf16.gmra.mrb[0].mxu0 %v125
  %v174 = vpop.f32.mrb[0].mxu0
  %v175 = vadd.f32 0.0, %v174
  %v176 = vpop.f32.mrb[0].mxu0
  %v177 = vpop.f32.mrb[0].mxu0
  %v178 = vadd.f32 0.0, %v177
  %v179 = vpop.f32.mrb[0].mxu0
  %180 = vmatprep.mubr.bf16.mxu0 0
  %181 = vmatmul.mubr.bf16.gmra.mrb[0].mxu0 %v128
  %v182 = vpop.f32.mrb[0].mxu0
  %v183 = vadd.f32 0.0, %v182
  %v184 = vpop.f32.mrb[0].mxu0
  %v185 = vpop.f32.mrb[0].mxu0
  %v186 = vadd.f32 0.0, %v185
  %v187 = vpop.f32.mrb[0].mxu0
  %188 = vmatprep.mubr.bf16.mxu0 0
  %189 = vmatmul.mubr.bf16.gmra.mrb[0].mxu0 %v131
  %v190 = vpop.f32.mrb[0].mxu0
  %v191 = vadd.f32 0.0, %v190
  %v192 = vpop.f32.mrb[0].mxu0
  %v193 = vpop.f32.mrb[0].mxu0
  %v194 = vadd.f32 0.0, %v193
  %v195 = vpop.f32.mrb[0].mxu0
  %196 = vmatprep.mubr.bf16.mxu0 0
  %197 = vmatmul.mubr.bf16.gmra.mrb[0].mxu0 %v134
  %v198 = vpop.f32.mrb[0].mxu0
  %v199 = vadd.f32 0.0, %v198
  %v200 = vpop.f32.mrb[0].mxu0
  %v201 = vpop.f32.mrb[0].mxu0
  %v202 = vadd.f32 0.0, %v201
  %v203 = vpop.f32.mrb[0].mxu0
  %204 = vdwg.mxu0
  %v205 = vpack.c.bf16 %v178, %v175
  %v206 = vpack.c.bf16 %v186, %v183
  %v207 = vpack.c.bf16 %v194, %v191
  %v208 = vpack.c.bf16 %v202, %v199
  %vm209 = vsmask.f32 7424
  %v211 = vshrl.u32 %v205, 16
  %v213 = vshll.u32 %v205, 16
  %v215 = vrot.slane %v213, 1
  %v216 = vor.u32 %v211, %v215
  %v218 = vshll.u32 %v206, 16
  %v220 = vrot.slane %v218, 1
  %v221 = vsel %vm209, %v216, %v220
  %v222 = vshrl.u32 %v206, 16
  %v224 = vor.u32 %v222, %v220
  %v226 = vshll.u32 %v207, 16
  %v228 = vrot.slane %v226, 1
  %v229 = vsel %vm209, %v224, %v228
  %v230 = vshrl.u32 %v207, 16
  %v232 = vor.u32 %v230, %v228
  %v234 = vshll.u32 %v208, 16
  %v236 = vrot.slane %v234, 1
  %v237 = vsel %vm209, %v232, %v236
  %v238 = vshrl.u32 %v208, 16
  %v240 = vor.u32 %v238, %v236
  %vm243 = vcmask 1047552
  %vm244 = vmand %vm243, %vm209
  %v245 = vsel %vm244, %v240, %v215
  %vm250 = vcmask 1046528
  %v251 = vrot.slane %v205, 1
  %v252 = vrot.slane %v206, 1
  %v253 = vsel %vm250, %v251, %v252
  %v254 = vrot.slane %v207, 1
  %v255 = vsel %vm250, %v252, %v254
  %v256 = vrot.slane %v208, 1
  %v257 = vsel %vm250, %v254, %v256
  %vm258 = vcmask 1046528
  %v261 = vsel %vm258, %v256, %v251
  %vm262 = vsmask.f32 6400
  %v263 = vrot.slane %v211, 1
  %v264 = vrot.slane %v213, 2
  %v265 = vor.u32 %v263, %v264
  %v266 = vrot.slane %v222, 1
  %v267 = vrot.slane %v218, 2
  %v268 = vor.u32 %v266, %v267
  %v269 = vsel %vm262, %v265, %v268
  %v270 = vrot.slane %v230, 1
  %v271 = vrot.slane %v226, 2
  %v272 = vor.u32 %v270, %v271
  %v273 = vsel %vm262, %v268, %v272
  %v274 = vrot.slane %v238, 1
  %v275 = vrot.slane %v234, 2
  %v276 = vor.u32 %v274, %v275
  %v277 = vsel %vm262, %v272, %v276
  %vm280 = vmand %vm250, %vm262
  %v281 = vsel %vm280, %v276, %v265
  %vm282 = vcmask 1045504
  %v283 = vrot.slane %v205, 2
  %v284 = vrot.slane %v206, 2
  %v285 = vsel %vm282, %v283, %v284
  %v286 = vrot.slane %v207, 2
  %v287 = vsel %vm282, %v284, %v286
  %v288 = vrot.slane %v208, 2
  %v289 = vsel %vm282, %v286, %v288
  %vm290 = vcmask 1045504
  %v293 = vsel %vm290, %v288, %v283
  %295 = vrot.lane.b32.xlu0 %v221, 32
  %v296 = vpop.permute.xlu0 %295
  %297 = vrot.lane.b32.xlu0 %v229, 32
  %v298 = vpop.permute.xlu0 %297
  %299 = vrot.lane.b32.xlu0 %v237, 32
  %v300 = vpop.permute.xlu0 %299
  %301 = vrot.lane.b32.xlu0 %v245, 32
  %v302 = vpop.permute.xlu0 %301
  %304 = vrot.lane.b32.xlu0 %v253, 64
  %v305 = vpop.permute.xlu0 %304
  %306 = vrot.lane.b32.xlu0 %v255, 64
  %v307 = vpop.permute.xlu0 %306
  %308 = vrot.lane.b32.xlu0 %v257, 64
  %v309 = vpop.permute.xlu0 %308
  %310 = vrot.lane.b32.xlu0 %v261, 64
  %v311 = vpop.permute.xlu0 %310
  %313 = vrot.lane.b32.xlu0 %v269, 96
  %v314 = vpop.permute.xlu0 %313
  %315 = vrot.lane.b32.xlu0 %v273, 96
  %v316 = vpop.permute.xlu0 %315
  %317 = vrot.lane.b32.xlu0 %v277, 96
  %v318 = vpop.permute.xlu0 %317
  %319 = vrot.lane.b32.xlu0 %v281, 96
  %v320 = vpop.permute.xlu0 %319
  %vm321 = vcmask 261120
  %v323 = vsel %vm321, %v205, %v296
  %v325 = vsel %vm321, %v206, %v298
  %v327 = vsel %vm321, %v207, %v300
  %v329 = vsel %vm321, %v208, %v302
  %vm330 = vcmask 523264
  %v332 = vsel %vm330, %v323, %v305
  %v334 = vsel %vm330, %v325, %v307
  %v336 = vsel %vm330, %v327, %v309
  %v338 = vsel %vm330, %v329, %v311
  %vm339 = vcmask 785408
  %v341 = vsel %vm339, %v332, %v314
  %v344 = vsel %vm339, %v334, %v316
  %v347 = vsel %vm339, %v336, %v318
  %v350 = vsel %vm339, %v338, %v320
  %v352 = vld [vmem:[%s2] sm:$0xf]
  %v353 = vld [vmem:[%s2 + $0x4] sm:$0xf]
  %v354 = vld [vmem:[%s2 + $0x8] sm:$0xf]
  %v355 = vld [vmem:[%s2 + $0xc] sm:$0xf]
  %v356 = vld [vmem:[%s2 + $0x10] sm:$0xf]
  %v357 = vld [vmem:[%s2 + $0x14] sm:$0xf]
  %v358 = vld [vmem:[%s2 + $0x18] sm:$0xf]
  %v359 = vld [vmem:[%s2 + $0x1c] sm:$0xf]
  %v360 = vld [vmem:[%s2 + $0x20] sm:$0xf]
  %v361 = vld [vmem:[%s2 + $0x24] sm:$0xf]
  %v362 = vld [vmem:[%s2 + $0x28] sm:$0xf]
  %v363 = vld [vmem:[%s2 + $0x2c] sm:$0xf]
  %v364 = vld [vmem:[%s2 + $0x30] sm:$0xf]
  %v365 = vld [vmem:[%s2 + $0x34] sm:$0xf]
  %v366 = vld [vmem:[%s2 + $0x38] sm:$0xf]
  %v367 = vld [vmem:[%s2 + $0x3c] sm:$0xf]
  %v368 = vld [vmem:[%s2 + $0x40] sm:$0xf]
  %v369 = vld [vmem:[%s2 + $0x44] sm:$0xf]
  %v370 = vld [vmem:[%s2 + $0x48] sm:$0xf]
  %v371 = vld [vmem:[%s2 + $0x4c] sm:$0xf]
  %v392 = vunpack.c.l.b16 %v352
  %v393 = vunpack.c.l.b16 %v353
  %v394 = vunpack.c.l.b16 %v354
  %v395 = vunpack.c.l.b16 %v355
  %v396 = vunpack.c.l.b16 %v356
  %v397 = vunpack.c.l.b16 %v357
  %v398 = vunpack.c.l.b16 %v358
  %v399 = vunpack.c.l.b16 %v359
  %v400 = vunpack.c.l.b16 %v360
  %v401 = vunpack.c.l.b16 %v361
  %v402 = vunpack.c.l.b16 %v362
  %v403 = vunpack.c.l.b16 %v363
  %v404 = vunpack.c.l.b16 %v364
  %v405 = vunpack.c.l.b16 %v365
  %v406 = vunpack.c.l.b16 %v366
  %v407 = vunpack.c.l.b16 %v367
  %v408 = vunpack.c.l.b16 %v368
  %v409 = vunpack.c.l.b16 %v369
  %v410 = vunpack.c.l.b16 %v370
  %v411 = vunpack.c.l.b16 %v371
  %v412 = vpack.c.b16 %v393, %v392
  %v413 = vpack.c.b16 %v395, %v394
  %v414 = vpack.c.b16 %v397, %v396
  %v415 = vpack.c.b16 %v399, %v398
  %v416 = vpack.c.b16 %v401, %v400
  %v417 = vpack.c.b16 %v403, %v402
  %v418 = vpack.c.b16 %v405, %v404
  %v419 = vpack.c.b16 %v407, %v406
  %v420 = vpack.c.b16 %v409, %v408
  %v421 = vpack.c.b16 %v411, %v410
  %v433 = vsel %vm321, %v285, 0
  %v436 = vsel %vm321, %v287, 0
  %v439 = vsel %vm321, %v289, 0
  %v441 = vsel %vm321, %v293, 0
  %443 = vmatprep.subr.bf16.mxu0 0
  %444 = vmatpush1.bf16.msra.mxu0 %v412
  %445 = vmatprep.subr.bf16.mxu0 0
  %446 = vmatpush1.bf16.msra.mxu0 %v413
  %447 = vmatprep.subr.bf16.mxu0 0
  %448 = vmatpush1.bf16.msra.mxu0 %v414
  %449 = vmatprep.subr.bf16.mxu0 0
  %450 = vmatpush1.bf16.msra.mxu0 %v415
  %451 = vmatprep.subr.bf16.mxu0 0
  %452 = vmatpush1.bf16.msra.mxu0 %v416
  %453 = vmatprep.subr.bf16.mxu0 0
  %454 = vmatpush1.bf16.msra.mxu0 %v417
  %455 = vmatprep.subr.bf16.mxu0 0
  %456 = vmatpush1.bf16.msra.mxu0 %v418
  %457 = vmatprep.subr.bf16.mxu0 0
  %458 = vmatpush1.bf16.msra.mxu0 %v419
  %459 = vmatprep.subr.bf16.mxu0 0
  %460 = vmatpush1.bf16.msra.mxu0 %v420
  %461 = vmatprep.subr.bf16.mxu0 0
  %462 = vmatpush1.bf16.msra.mxu0 %v421
  %463 = vmatprep.subr.bf16.mxu0 0
  %464 = vmatpush1.bf16.msra.mxu0 0
  %465 = vmatprep.subr.bf16.mxu0 0
  %466 = vmatpush1.bf16.msra.mxu0 0
  %467 = vmatprep.subr.bf16.mxu0 0
  %468 = vmatpush1.bf16.msra.mxu0 0
  %469 = vmatprep.subr.bf16.mxu0 0
  %470 = vmatpush1.bf16.msra.mxu0 0
  %471 = vmatprep.subr.bf16.mxu0 0
  %472 = vmatpush1.bf16.msra.mxu0 0
  %473 = vmatprep.subr.bf16.mxu0 0
  %474 = vmatpush1.bf16.msra.mxu0 0
  %475 = vmatprep.mubr.bf16.mxu0 %v433
  %476 = vmatmul.mubr.bf16.gmra.mrb[0].mxu0 %v341
  %v477 = vpop.f32.mrb[0].mxu0
  %v478 = vadd.f32 0.0, %v477
  %v479 = vpop.f32.mrb[0].mxu0
  %v480 = vpop.f32.mrb[0].mxu0
  %v481 = vadd.f32 0.0, %v480
  %v482 = vpop.f32.mrb[0].mxu0
  %483 = vmatprep.mubr.bf16.mxu0 %v436
  %484 = vmatmul.mubr.bf16.gmra.mrb[0].mxu0 %v344
  %v485 = vpop.f32.mrb[0].mxu0
  %v486 = vadd.f32 0.0, %v485
  %v487 = vpop.f32.mrb[0].mxu0
  %v488 = vpop.f32.mrb[0].mxu0
  %v489 = vadd.f32 0.0, %v488
  %v490 = vpop.f32.mrb[0].mxu0
  %491 = vmatprep.mubr.bf16.mxu0 %v439
  %492 = vmatmul.mubr.bf16.gmra.mrb[0].mxu0 %v347
  %v493 = vpop.f32.mrb[0].mxu0
  %v494 = vadd.f32 0.0, %v493
  %v495 = vpop.f32.mrb[0].mxu0
  %v496 = vpop.f32.mrb[0].mxu0
  %v497 = vadd.f32 0.0, %v496
  %v498 = vpop.f32.mrb[0].mxu0
  %499 = vmatprep.mubr.bf16.mxu0 %v441
  %500 = vmatmul.mubr.bf16.gmra.mrb[0].mxu0 %v350
  %v501 = vpop.f32.mrb[0].mxu0
  %v502 = vadd.f32 0.0, %v501
  %v503 = vpop.f32.mrb[0].mxu0
  %v504 = vpop.f32.mrb[0].mxu0
  %v505 = vadd.f32 0.0, %v504
  %v506 = vpop.f32.mrb[0].mxu0
  %507 = vdwg.mxu0
  %v508 = vld [vmem:[%s3] sm:$0xff]
  %v509 = vadd.f32 %v478, %v508
  %v510 = vadd.f32 %v481, %v508
  %v511 = vadd.f32 %v486, %v508
  %v512 = vadd.f32 %v489, %v508
  %v513 = vadd.f32 %v494, %v508
  %v514 = vadd.f32 %v497, %v508
  %v515 = vadd.f32 %v502, %v508
  %v516 = vadd.f32 %v505, %v508
  %v517 = vmax.f32 %v509, 0.0
  %v518 = vmax.f32 %v510, 0.0
  %v519 = vmax.f32 %v511, 0.0
  %v520 = vmax.f32 %v512, 0.0
  %v521 = vmax.f32 %v513, 0.0
  %v522 = vmax.f32 %v514, 0.0
  %v523 = vmax.f32 %v515, 0.0
  %v524 = vmax.f32 %v516, 0.0
  %v525 = vrot.slane %v517, 4
  %v526 = vmax.f32 %v517, %v525
  %v527 = vrot.slane %v526, 2
  %v528 = vmax.f32 %v526, %v527
  %v529 = vrot.slane %v528, 1
  %v530 = vmax.f32 %v528, %v529
  %v531 = vrot.slane %v518, 4
  %v532 = vmax.f32 %v518, %v531
  %v533 = vrot.slane %v532, 2
  %v534 = vmax.f32 %v532, %v533
  %v535 = vrot.slane %v534, 1
  %v536 = vmax.f32 %v534, %v535
  %v537 = vrot.slane %v519, 4
  %v538 = vmax.f32 %v519, %v537
  %v539 = vrot.slane %v538, 2
  %v540 = vmax.f32 %v538, %v539
  %v541 = vrot.slane %v540, 1
  %v542 = vmax.f32 %v540, %v541
  %v543 = vrot.slane %v520, 4
  %v544 = vmax.f32 %v520, %v543
  %v545 = vrot.slane %v544, 2
  %v546 = vmax.f32 %v544, %v545
  %v547 = vrot.slane %v546, 1
  %v548 = vmax.f32 %v546, %v547
  %v549 = vrot.slane %v521, 4
  %v550 = vmax.f32 %v521, %v549
  %v551 = vrot.slane %v550, 2
  %v552 = vmax.f32 %v550, %v551
  %v553 = vrot.slane %v552, 1
  %v554 = vmax.f32 %v552, %v553
  %v555 = vrot.slane %v522, 4
  %v556 = vmax.f32 %v522, %v555
  %v557 = vrot.slane %v556, 2
  %v558 = vmax.f32 %v556, %v557
  %v559 = vrot.slane %v558, 1
  %v560 = vmax.f32 %v558, %v559
  %v561 = vrot.slane %v523, 4
  %v562 = vmax.f32 %v523, %v561
  %v563 = vrot.slane %v562, 2
  %v564 = vmax.f32 %v562, %v563
  %v565 = vrot.slane %v564, 1
  %v566 = vmax.f32 %v564, %v565
  %v567 = vrot.slane %v524, 4
  %v568 = vmax.f32 %v524, %v567
  %v569 = vrot.slane %v568, 2
  %v570 = vmax.f32 %v568, %v569
  %v571 = vrot.slane %v570, 1
  %v572 = vmax.f32 %v570, %v571
  %v573 = vmax.f32 %v530, 0.0
  %v574 = vmax.f32 %v536, 0.0
  %v575 = vmax.f32 %v542, 0.0
  %v576 = vmax.f32 %v548, 0.0
  %v577 = vmax.f32 %v554, 0.0
  %v578 = vmax.f32 %v560, 0.0
  %v579 = vmax.f32 %v566, 0.0
  %v580 = vmax.f32 %v572, 0.0
  %v581 = vld [vmem:[%s4] sm:$0xff]
  %v582 = vld [vmem:[%s4 + $0x8] sm:$0xff]
  %v583 = vld [vmem:[%s4 + $0x10] sm:$0xff]
  %v584 = vld [vmem:[%s4 + $0x18] sm:$0xff]
  %v585 = vld [vmem:[%s4 + $0x20] sm:$0xff]
  %v586 = vld [vmem:[%s4 + $0x28] sm:$0xff]
  %v587 = vld [vmem:[%s4 + $0x30] sm:$0xff]
  %v588 = vld [vmem:[%s4 + $0x38] sm:$0xff]
  %v589 = vld [vmem:[%s4 + $0x40] sm:$0xff]
  %v590 = vld [vmem:[%s4 + $0x48] sm:$0xff]
  %v591 = vld [vmem:[%s4 + $0x50] sm:$0xff]
  %v592 = vld [vmem:[%s4 + $0x58] sm:$0xff]
  %v593 = vld [vmem:[%s4 + $0x60] sm:$0xff]
  %v594 = vld [vmem:[%s4 + $0x68] sm:$0xff]
  %v595 = vld [vmem:[%s4 + $0x70] sm:$0xff]
  %v596 = vld [vmem:[%s4 + $0x78] sm:$0xff]
  %v597 = vld [vmem:[%s5] sm:$0x1]
  %v599 = vlaneseq
  %v600 = vshrl.u32 %v599, 7
  %v601 = vsub.s32 0, %v600
  %v602 = vrot.slane %v597, %v601
  %vm612 = vcmask 1041409
  %v613 = vsel %vm612, %v574, %v573
  %vm614 = vcmask 1042434
  %v615 = vsel %vm614, %v575, %v613
  %vm616 = vcmask 1043459
  %v617 = vsel %vm616, %v576, %v615
  %vm618 = vcmask 1044484
  %v619 = vsel %vm618, %v577, %v617
  %vm620 = vcmask 1045509
  %v621 = vsel %vm620, %v578, %v619
  %vm622 = vcmask 1046534
  %v623 = vsel %vm622, %v579, %v621
  %vm624 = vcmask 1047559
  %v625 = vsel %vm624, %v580, %v623
  %627 = vmatprep.subr.mxu0 0.0
  %628 = vmatpush1.msra.mxu0 %v581
  %629 = vmatprep.subr.mxu0 0.0
  %630 = vmatpush1.msra.mxu0 %v582
  %631 = vmatprep.subr.mxu0 0.0
  %632 = vmatpush1.msra.mxu0 %v583
  %633 = vmatprep.subr.mxu0 0.0
  %634 = vmatpush1.msra.mxu0 %v584
  %635 = vmatprep.subr.mxu0 0.0
  %636 = vmatpush1.msra.mxu0 %v585
  %637 = vmatprep.subr.mxu0 0.0
  %638 = vmatpush1.msra.mxu0 %v586
  %639 = vmatprep.subr.mxu0 0.0
  %640 = vmatpush1.msra.mxu0 %v587
  %641 = vmatprep.subr.mxu0 0.0
  %642 = vmatpush1.msra.mxu0 %v588
  %643 = vmatprep.subr.mxu0 0.0
  %644 = vmatpush1.msra.mxu0 %v589
  %645 = vmatprep.subr.mxu0 0.0
  %646 = vmatpush1.msra.mxu0 %v590
  %647 = vmatprep.subr.mxu0 0.0
  %648 = vmatpush1.msra.mxu0 %v591
  %649 = vmatprep.subr.mxu0 0.0
  %650 = vmatpush1.msra.mxu0 %v592
  %651 = vmatprep.subr.mxu0 0.0
  %652 = vmatpush1.msra.mxu0 %v593
  %653 = vmatprep.subr.mxu0 0.0
  %654 = vmatpush1.msra.mxu0 %v594
  %655 = vmatprep.subr.mxu0 0.0
  %656 = vmatpush1.msra.mxu0 %v595
  %657 = vmatprep.subr.mxu0 0.0
  %658 = vmatpush1.msra.mxu0 %v596
  %659 = vmatprep.subr.mxu0 0.0
  %660 = vmatpush1.msra.mxu0 0.0
  %661 = vmatprep.subr.mxu0 0.0
  %662 = vmatpush1.msra.mxu0 0.0
  %663 = vmatprep.subr.mxu0 0.0
  %664 = vmatpush1.msra.mxu0 0.0
  %665 = vmatprep.subr.mxu0 0.0
  %666 = vmatpush1.msra.mxu0 0.0
  %667 = vmatprep.subr.mxu0 0.0
  %668 = vmatpush1.msra.mxu0 0.0
  %669 = vmatprep.subr.mxu0 0.0
  %670 = vmatpush1.msra.mxu0 0.0
  %671 = vmatprep.subr.mxu0 0.0
  %672 = vmatpush1.msra.mxu0 0.0
  %673 = vmatprep.subr.mxu0 0.0
  %674 = vmatpush1.msra.mxu0 0.0
  %675 = vmatprep.subr.mxu0 0.0
  %676 = vmatpush1.msra.mxu0 0.0
  %677 = vmatprep.subr.mxu0 0.0
  %678 = vmatpush1.msra.mxu0 0.0
  %679 = vmatprep.subr.mxu0 0.0
  %680 = vmatpush1.msra.mxu0 0.0
  %681 = vmatprep.subr.mxu0 0.0
  %682 = vmatpush1.msra.mxu0 0.0
  %683 = vmatprep.subr.mxu0 0.0
  %684 = vmatpush1.msra.mxu0 0.0
  %685 = vmatprep.subr.mxu0 0.0
  %686 = vmatpush1.msra.mxu0 0.0
  %687 = vmatprep.subr.mxu0 0.0
  %688 = vmatpush1.msra.mxu0 0.0
  %689 = vmatprep.subr.mxu0 0.0
  %690 = vmatpush1.msra.mxu0 0.0
  %691 = vmatprep.mubr.f32.mxu0 0.0
  %692 = vmatmul.mubr.f32.gmra.mrb[0].mxu0 %v625
  %v693 = vpop.f32.mrb[0].mxu0
  %v694 = vadd.f32 %v602, %v693
  %v695 = vpop.f32.mrb[0].mxu0
  %696 = vdwg.mxu0
  %v697 = vld [vmem:[%s6] sm:$0x1]
  %v699 = vlaneseq
  %v700 = vshrl.u32 %v699, 7
  %v701 = vsub.s32 0, %v700
  %v702 = vrot.slane %v697, %v701
  %v704 = vmul.f32 %v694, %v702
  %vm705 = vcmask 15360
  %v706 = vsel %vm705, %v704, 0.0
  %707 = vadd.xlane.f32.xlu0 %v706
  %v708 = vpop.xlane.xlu0 %707
  %v709 = vld [vmem:[#allocation2] sm:$0x1]
  %v711 = vlaneseq
  %v712 = vshrl.u32 %v711, 7
  %v713 = vsub.s32 0, %v712
  %v714 = vrot.slane %v709, %v713
  %v716 = vadd.f32 %v708, %v714
  %vm717 = vcmask 7168
  %718 = vst.msk [vmem:[%s8] sm:$0xff] %vm717, %v716
  // Predicated region
  $region34: #{tpu_custom_call.1} parent=0 // pred_check
    _
  $region35: #{tpu_custom_call.1} parent=0 // pred_check_branch
    %720 = sbr.rel (0) target = $region37
  $region36: #{tpu_custom_call.1} parent=0 // pred_region
    _
  $region37: #{tpu_custom_call.1} parent=0 // pred_fallthru
    _
  // Predicated region
  $region38: #{tpu_custom_call.1} parent=0 // pred_check
    _
  $region39: #{tpu_custom_call.1} parent=0 // pred_check_branch
    %722 = sbr.rel (0) target = $region41
  $region40: #{tpu_custom_call.1} parent=0 // pred_region
    _
  $region41: #{tpu_custom_call.1} parent=0 // pred_fallthru
    _

</llo_original>
